<compile_context>
chip_gen: v5e
topology: v5e:2x2
jax: 0.10.0
libtpu: 0.0.40
codegen_flags: <defaults>
</compile_context>

<pallas_src>
import functools

import jax
import jax.numpy as jnp
from jax import lax
from jax.experimental import pallas as pl
from jax.experimental.pallas import tpu as pltpu

# Fits every generation's physical VMEM (v7x: 64 MiB/TC). On v6e you may raise
# this to ~96 MiB and grow (tm, tn) to 1024-2048 for MXU-bound operation.
_VMEM_LIMIT_BYTES = 48 * 1024 * 1024


def _erf(z):
    # Abramowitz & Stegun 7.1.26, max abs error ~1.5e-7.  Uses only VPU ops +
    # one EUP exp, so it lowers cleanly in Mosaic.
    p = 0.3275911
    a1, a2, a3, a4, a5 = (0.254829592, -0.284496736, 1.421413741,
                          -1.453152027, 1.061405429)
    za = jnp.abs(z)
    t = 1.0 / (1.0 + p * za)
    poly = ((((a5 * t + a4) * t + a3) * t + a2) * t + a1) * t
    y = 1.0 - poly * jnp.exp(-za * za)
    return jnp.where(z >= 0.0, y, -y)


def _gelu_exact(y):
    # Exact (erf) GELU — matches HF BertPredictionHeadTransform's default "gelu".
    return 0.5 * y * (1.0 + _erf(y * 0.7071067811865475))


# ----------------------------------------------------------------------------
# Kernel 1: BertPredictionHeadTransform  (dense -> GELU -> LayerNorm)
#   grid = (M // tm,); the [H, H] dense weight is fully resident.
# ----------------------------------------------------------------------------
def transform_kernel(x_ref, wd_ref, bd_ref, gamma_ref, beta_ref, o_ref, *, ln_eps):
    # PyTorch [out, in] weight layout: contract the last dims of both operands
    # (no transpose anywhere), f32 accumulation on the MXU.
    y = lax.dot_general(x_ref[...], wd_ref[...],
                        (((1,), (1,)), ((), ())),
                        preferred_element_type=jnp.float32)
    y = y + bd_ref[...].astype(jnp.float32)
    y = _gelu_exact(y)
    # LayerNorm, single-pass variance: E[y^2] - mean^2.
    mean = jnp.mean(y, axis=-1, keepdims=True)
    var = jnp.mean(y * y, axis=-1, keepdims=True) - mean * mean
    y = (y - mean) * lax.rsqrt(var + ln_eps)
    y = y * gamma_ref[...].astype(jnp.float32) + beta_ref[...].astype(jnp.float32)
    o_ref[...] = y.astype(o_ref.dtype)


# ----------------------------------------------------------------------------
# Kernel 2: decoder — [tm, H] x [tn, H]^T + bias; no K grid axis, no acc scratch.
#   grid = (M // tm, V // tn); h block index is constant over j => resident.
# ----------------------------------------------------------------------------
def decoder_kernel(h_ref, w_ref, b_ref, o_ref):
    y = lax.dot_general(h_ref[...], w_ref[...],
                        (((1,), (1,)), ((), ())),
                        preferred_element_type=jnp.float32)
    o_ref[...] = (y + b_ref[...].astype(jnp.float32)).astype(o_ref.dtype)


def _round_up(x, m):
    return ((x + m - 1) // m) * m


def mlm_head_forward(x, dense_w, dense_b, ln_gamma, ln_beta, dec_w, dec_bias,
                     *, ln_eps=1e-12, tm=512, tn=1024,
                     compute_dtype=None, out_dtype=None):
    """MLMHead forward.

    x:        [B, S, H]
    dense_w:  [H, H]   (PyTorch nn.Linear layout: [out_features, in_features])
    dense_b:  [H]
    ln_gamma: [H]      LayerNorm weight
    ln_beta:  [H]      LayerNorm bias
    dec_w:    [V, H]   (PyTorch layout; never transposed by this wrapper)
    dec_bias: [V]
    compute_dtype: optional cast for MXU operands (use jnp.bfloat16 in prod).
    returns:  [B, S, V] in `out_dtype` (defaults to operand dtype)
    """
    if compute_dtype is not None:
        x = x.astype(compute_dtype)
        dense_w = dense_w.astype(compute_dtype)
        dec_w = dec_w.astype(compute_dtype)
    out_dtype = out_dtype or x.dtype

    B, S, H = x.shape
    V = dec_w.shape[0]
    M = B * S
    x2 = x.reshape(M, H)

    # bf16 operands need 16-row sublane packing; f32 needs 8. Vocab tiles stay
    # multiples of 128 for full MXU passes and lane-dense, unmasked stores.
    sub = 16 if x2.dtype == jnp.bfloat16 else 8
    tm_ = max(sub, (tm // sub) * sub)
    tm_ = min(tm_, _round_up(M, sub))
    tn_ = max(128, (tn // 128) * 128)
    tn_ = min(tn_, _round_up(V, 128))

    M_pad = _round_up(M, tm_)
    V_pad = _round_up(V, tn_)

    if M_pad != M:
        x2 = jnp.pad(x2, ((0, M_pad - M), (0, 0)))
    if V_pad != V:
        # TODO(synk): store decoder weight/bias pre-padded to a 128-multiple vocab
        # outside the forward so this per-call pad becomes a no-op.
        dec_w = jnp.pad(dec_w, ((0, V_pad - V), (0, 0)))
        dec_bias = jnp.pad(dec_bias, (0, V_pad - V))

    bd2 = dense_b.reshape(1, H)
    g2 = ln_gamma.reshape(1, H)
    be2 = ln_beta.reshape(1, H)
    dec_b2 = dec_bias.reshape(1, V_pad)

    # --- Kernel 1: dense + GELU + LayerNorm (dense weight resident) ---
    h = pl.pallas_call(
        functools.partial(transform_kernel, ln_eps=ln_eps),
        out_shape=jax.ShapeDtypeStruct((M_pad, H), x2.dtype),
        grid_spec=pltpu.PrefetchScalarGridSpec(
            num_scalar_prefetch=0,
            grid=(M_pad // tm_,),
            in_specs=[
                pl.BlockSpec((tm_, H), lambda i: (i, 0)),   # x tile
                pl.BlockSpec((H, H), lambda i: (0, 0)),     # dense W (resident)
                pl.BlockSpec((1, H), lambda i: (0, 0)),     # dense bias
                pl.BlockSpec((1, H), lambda i: (0, 0)),     # LN gamma
                pl.BlockSpec((1, H), lambda i: (0, 0)),     # LN beta
            ],
            out_specs=pl.BlockSpec((tm_, H), lambda i: (i, 0)),
        ),
        compiler_params=pltpu.CompilerParams(
            dimension_semantics=("parallel",),
            vmem_limit_bytes=_VMEM_LIMIT_BYTES),
    )(x2, dense_w, bd2, g2, be2)

    # --- Kernel 2: decoder projection + bias (activation resident over vocab) ---
    logits = pl.pallas_call(
        decoder_kernel,
        out_shape=jax.ShapeDtypeStruct((M_pad, V_pad), out_dtype),
        grid_spec=pltpu.PrefetchScalarGridSpec(
            num_scalar_prefetch=0,
            grid=(M_pad // tm_, V_pad // tn_),
            in_specs=[
                pl.BlockSpec((tm_, H), lambda i, j: (i, 0)),    # h tile (constant over j)
                pl.BlockSpec((tn_, H), lambda i, j: (j, 0)),    # decoder W block [V, H] layout
                pl.BlockSpec((1, tn_), lambda i, j: (0, j)),    # bias tile
            ],
            out_specs=pl.BlockSpec((tm_, tn_), lambda i, j: (i, j)),
        ),
        compiler_params=pltpu.CompilerParams(
            dimension_semantics=("parallel", "parallel"),
            vmem_limit_bytes=_VMEM_LIMIT_BYTES),
    )(h, dec_w, dec_b2)

    return logits[:M, :V].reshape(B, S, V)


if __name__ == "__main__":
    key = jax.random.PRNGKey(0)
    # Small shapes; V deliberately NOT a multiple of 128 to exercise padding.
    B, S, H, V = 2, 8, 256, 300

    ks = jax.random.split(key, 7)
    x = jax.random.normal(ks[0], (B, S, H), dtype=jnp.float32)
    bound = 1.0 / (H ** 0.5)
    dense_w = jax.random.uniform(ks[1], (H, H), jnp.float32, -bound, bound)
    dense_b = jax.random.uniform(ks[2], (H,), jnp.float32, -bound, bound)
    ln_gamma = 1.0 + 0.1 * jax.random.normal(ks[3], (H,), dtype=jnp.float32)
    ln_beta = 0.1 * jax.random.normal(ks[4], (H,), dtype=jnp.float32)
    dec_w = jax.random.uniform(ks[5], (V, H), jnp.float32, -bound, bound)
    dec_bias = 0.02 * jax.random.normal(ks[6], (V,), dtype=jnp.float32)

    # Small tiles purely to exercise the multi-tile grid + padding/slicing paths;
    # production defaults are tm=512, tn=1024 (and compute_dtype=jnp.bfloat16).
    out = mlm_head_forward(x, dense_w, dense_b, ln_gamma, ln_beta,
                           dec_w, dec_bias, tm=8, tn=128)
    out = jax.block_until_ready(out)

    # Plain-JAX reference (exact erf GELU, two-pass LayerNorm).
    def ref_fn(xx):
        h = xx @ dense_w.T + dense_b
        h = jax.nn.gelu(h, approximate=False)
        mean = h.mean(-1, keepdims=True)
        var = ((h - mean) ** 2).mean(-1, keepdims=True)
        h = (h - mean) * jax.lax.rsqrt(var + 1e-12)
        h = h * ln_gamma + ln_beta
        return h @ dec_w.T + dec_bias

    ref = ref_fn(x)
    assert out.shape == (B, S, V)
    max_err = float(jnp.max(jnp.abs(out - ref)))
    assert jnp.allclose(out, ref, atol=2e-3, rtol=2e-3), max_err

    print("KERNEL_OK")
</pallas_src>

<mosaic_0001>
module attributes {stable_mosaic.version = 11 : i64} {
  func.func @transform_kernel(%arg0: i32, %arg1: memref<8x256xf32, #tpu.memory_space<vmem>>, %arg2: memref<256x256xf32, #tpu.memory_space<vmem>>, %arg3: memref<1x256xf32, #tpu.memory_space<vmem>>, %arg4: memref<1x256xf32, #tpu.memory_space<vmem>>, %arg5: memref<1x256xf32, #tpu.memory_space<vmem>>, %arg6: memref<8x256xf32, #tpu.memory_space<vmem>>) attributes {dimension_semantics = [#tpu.dimension_semantics<parallel>], iteration_bounds = array<i64: 2>, scalar_prefetch = 0 : i64, scratch_operands = 0 : i64, tpu.core_type = #tpu.core_type<tc>, window_params = [{transform_indices = @transform_0, window_bounds = array<i64: 8, 256>}, {pipeline_mode = #tpu.pipeline_mode<synchronous>, transform_indices = @transform_1, window_bounds = array<i64: 256, 256>}, {pipeline_mode = #tpu.pipeline_mode<synchronous>, transform_indices = @transform_2, window_bounds = array<i64: 1, 256>}, {pipeline_mode = #tpu.pipeline_mode<synchronous>, transform_indices = @transform_3, window_bounds = array<i64: 1, 256>}, {pipeline_mode = #tpu.pipeline_mode<synchronous>, transform_indices = @transform_4, window_bounds = array<i64: 1, 256>}, {transform_indices = @transform_5, window_bounds = array<i64: 8, 256>}]} {
    %c0 = arith.constant 0 : index
    %c0_0 = arith.constant 0 : index
    %0 = vector.load %arg1[%c0, %c0_0] : memref<8x256xf32, #tpu.memory_space<vmem>>, vector<8x256xf32>
    %c0_1 = arith.constant 0 : index
    %c0_2 = arith.constant 0 : index
    %1 = vector.load %arg2[%c0_1, %c0_2] : memref<256x256xf32, #tpu.memory_space<vmem>>, vector<256x256xf32>
    %cst = arith.constant dense<0.000000e+00> : vector<8x256xf32>
    %2 = tpu.matmul %0, %1, %cst {dimension_numbers = #tpu.dot_dimension_numbers<[1], [1], [0], [0], [0, 0, 1, 0], [], []>} : vector<8x256xf32>, vector<256x256xf32>, vector<8x256xf32> -> vector<8x256xf32>
    %c0_3 = arith.constant 0 : index
    %c0_4 = arith.constant 0 : index
    %3 = vector.load %arg3[%c0_3, %c0_4] : memref<1x256xf32, #tpu.memory_space<vmem>>, vector<1x256xf32>
    %4 = vector.broadcast %3 : vector<1x256xf32> to vector<8x256xf32>
    %5 = arith.addf %2, %4 : vector<8x256xf32>
    %cst_5 = arith.constant 5.000000e-01 : f32
    %6 = vector.broadcast %cst_5 : f32 to vector<8x256xf32>
    %7 = arith.mulf %6, %5 : vector<8x256xf32>
    %cst_6 = arith.constant 0.707106769 : f32
    %8 = vector.broadcast %cst_6 : f32 to vector<8x256xf32>
    %9 = arith.mulf %5, %8 : vector<8x256xf32>
    %10 = math.absf %9 : vector<8x256xf32>
    %cst_7 = arith.constant 0.327591091 : f32
    %11 = vector.broadcast %cst_7 : f32 to vector<8x256xf32>
    %12 = arith.mulf %11, %10 : vector<8x256xf32>
    %cst_8 = arith.constant 1.000000e+00 : f32
    %13 = vector.broadcast %cst_8 : f32 to vector<8x256xf32>
    %14 = arith.addf %13, %12 : vector<8x256xf32>
    %cst_9 = arith.constant 1.000000e+00 : f32
    %15 = vector.broadcast %cst_9 : f32 to vector<8x256xf32>
    %16 = arith.divf %15, %14 : vector<8x256xf32>
    %cst_10 = arith.constant 1.06140542 : f32
    %17 = vector.broadcast %cst_10 : f32 to vector<8x256xf32>
    %18 = arith.mulf %17, %16 : vector<8x256xf32>
    %cst_11 = arith.constant -1.45315206 : f32
    %19 = vector.broadcast %cst_11 : f32 to vector<8x256xf32>
    %20 = arith.addf %18, %19 : vector<8x256xf32>
    %21 = arith.mulf %20, %16 : vector<8x256xf32>
    %cst_12 = arith.constant 1.42141378 : f32
    %22 = vector.broadcast %cst_12 : f32 to vector<8x256xf32>
    %23 = arith.addf %21, %22 : vector<8x256xf32>
    %24 = arith.mulf %23, %16 : vector<8x256xf32>
    %cst_13 = arith.constant -0.284496725 : f32
    %25 = vector.broadcast %cst_13 : f32 to vector<8x256xf32>
    %26 = arith.addf %24, %25 : vector<8x256xf32>
    %27 = arith.mulf %26, %16 : vector<8x256xf32>
    %cst_14 = arith.constant 0.254829586 : f32
    %28 = vector.broadcast %cst_14 : f32 to vector<8x256xf32>
    %29 = arith.addf %27, %28 : vector<8x256xf32>
    %30 = arith.mulf %29, %16 : vector<8x256xf32>
    %cst_15 = arith.constant 0.000000e+00 : f32
    %31 = vector.broadcast %cst_15 : f32 to vector<8x256xf32>
    %32 = arith.subf %31, %10 : vector<8x256xf32>
    %33 = arith.mulf %32, %10 : vector<8x256xf32>
    %34 = math.exp %33 : vector<8x256xf32>
    %35 = arith.mulf %30, %34 : vector<8x256xf32>
    %cst_16 = arith.constant 1.000000e+00 : f32
    %36 = vector.broadcast %cst_16 : f32 to vector<8x256xf32>
    %37 = arith.subf %36, %35 : vector<8x256xf32>
    %cst_17 = arith.constant 0.000000e+00 : f32
    %38 = vector.broadcast %cst_17 : f32 to vector<8x256xf32>
    %39 = arith.cmpf oge, %9, %38 : vector<8x256xf32>
    %cst_18 = arith.constant 0.000000e+00 : f32
    %40 = vector.broadcast %cst_18 : f32 to vector<8x256xf32>
    %41 = arith.subf %40, %37 : vector<8x256xf32>
    %42 = arith.select %39, %37, %41 : vector<8x256xi1>, vector<8x256xf32>
    %cst_19 = arith.constant 1.000000e+00 : f32
    %43 = vector.broadcast %cst_19 : f32 to vector<8x256xf32>
    %44 = arith.addf %43, %42 : vector<8x256xf32>
    %45 = arith.mulf %7, %44 : vector<8x256xf32>
    %cst_20 = arith.constant dense<0.000000e+00> : vector<8xf32>
    %46 = vector.multi_reduction <add>, %45, %cst_20 [1] : vector<8x256xf32> to vector<8xf32>
    %47 = vector.shape_cast %46 : vector<8xf32> to vector<8x1xf32>
    %cst_21 = arith.constant 2.560000e+02 : f32
    %48 = vector.broadcast %cst_21 : f32 to vector<8x1xf32>
    %49 = arith.divf %47, %48 : vector<8x1xf32>
    %50 = arith.mulf %45, %45 : vector<8x256xf32>
    %cst_22 = arith.constant dense<0.000000e+00> : vector<8xf32>
    %51 = vector.multi_reduction <add>, %50, %cst_22 [1] : vector<8x256xf32> to vector<8xf32>
    %52 = vector.shape_cast %51 : vector<8xf32> to vector<8x1xf32>
    %cst_23 = arith.constant 2.560000e+02 : f32
    %53 = vector.broadcast %cst_23 : f32 to vector<8x1xf32>
    %54 = arith.divf %52, %53 : vector<8x1xf32>
    %55 = arith.mulf %49, %49 : vector<8x1xf32>
    %56 = arith.subf %54, %55 : vector<8x1xf32>
    %57 = vector.broadcast %49 : vector<8x1xf32> to vector<8x256xf32>
    %58 = arith.subf %45, %57 : vector<8x256xf32>
    %cst_24 = arith.constant 9.99999996E-13 : f32
    %59 = vector.broadcast %cst_24 : f32 to vector<8x1xf32>
    %60 = arith.addf %56, %59 : vector<8x1xf32>
    %61 = math.rsqrt %60 : vector<8x1xf32>
    %62 = vector.broadcast %61 : vector<8x1xf32> to vector<8x256xf32>
    %63 = arith.mulf %58, %62 : vector<8x256xf32>
    %c0_25 = arith.constant 0 : index
    %c0_26 = arith.constant 0 : index
    %64 = vector.load %arg4[%c0_25, %c0_26] : memref<1x256xf32, #tpu.memory_space<vmem>>, vector<1x256xf32>
    %65 = vector.broadcast %64 : vector<1x256xf32> to vector<8x256xf32>
    %66 = arith.mulf %63, %65 : vector<8x256xf32>
    %c0_27 = arith.constant 0 : index
    %c0_28 = arith.constant 0 : index
    %67 = vector.load %arg5[%c0_27, %c0_28] : memref<1x256xf32, #tpu.memory_space<vmem>>, vector<1x256xf32>
    %68 = vector.broadcast %67 : vector<1x256xf32> to vector<8x256xf32>
    %69 = arith.addf %66, %68 : vector<8x256xf32>
    %c0_29 = arith.constant 0 : index
    %c0_30 = arith.constant 0 : index
    %70 = vector.load %arg6[%c0_29, %c0_30] : memref<8x256xf32, #tpu.memory_space<vmem>>, vector<8x256xf32>
    tpu.vector_store %arg6[%c0_29, %c0_30], %69 {strides = array<i32>} : memref<8x256xf32, #tpu.memory_space<vmem>>, vector<8x256xf32>,
    return
  }
  func.func @transform_0(%arg0: i32) -> (i32, i32) {
    %c0_i32 = arith.constant 0 : i32
    %c0_i32_0 = arith.constant 0 : i32
    return %arg0, %c0_i32 : i32, i32
  }
  func.func @transform_1(%arg0: i32) -> (i32, i32) {
    %c0_i32 = arith.constant 0 : i32
    %c0_i32_0 = arith.constant 0 : i32
    %c0_i32_1 = arith.constant 0 : i32
    return %c0_i32, %c0_i32_0 : i32, i32
  }
  func.func @transform_2(%arg0: i32) -> (i32, i32) {
    %c0_i32 = arith.constant 0 : i32
    %c0_i32_0 = arith.constant 0 : i32
    %c0_i32_1 = arith.constant 0 : i32
    return %c0_i32, %c0_i32_0 : i32, i32
  }
  func.func @transform_3(%arg0: i32) -> (i32, i32) {
    %c0_i32 = arith.constant 0 : i32
    %c0_i32_0 = arith.constant 0 : i32
    %c0_i32_1 = arith.constant 0 : i32
    return %c0_i32, %c0_i32_0 : i32, i32
  }
  func.func @transform_4(%arg0: i32) -> (i32, i32) {
    %c0_i32 = arith.constant 0 : i32
    %c0_i32_0 = arith.constant 0 : i32
    %c0_i32_1 = arith.constant 0 : i32
    return %c0_i32, %c0_i32_0 : i32, i32
  }
  func.func @transform_5(%arg0: i32) -> (i32, i32) {
    %c0_i32 = arith.constant 0 : i32
    %c0_i32_0 = arith.constant 0 : i32
    return %arg0, %c0_i32 : i32, i32
  }
}

</mosaic_0001>

<llo_original>
// kernel: tpu_custom_call.1
$region0: #{tpu_custom_call.1}
  #allocation0 [shape = 'u32[]', space=smem, size = 0x4, offset = 0x4, fixed_abs, tag = 'smem constant byte address 0x4 - core index']
  #allocation1 [shape = 'u32[72,128]{1,0:T(1,128)}', space=vmem, size = 0x9000, scoped, tag = 'internal scratch']
  %s0 = inlined_call_operand.hbm [shape: f32[16,256], index: 0, kind: input, shape index: {}]
  %s1 = inlined_call_operand.hbm [shape: f32[256,256], index: 1, kind: input, shape index: {}]
  %s2 = inlined_call_operand.hbm [shape: f32[1,256], index: 2, kind: input, shape index: {}]
  %s3 = inlined_call_operand.vmem [shape: f32[1,256], index: 3, kind: input, shape index: {}]
  %s4 = inlined_call_operand.hbm [shape: f32[1,256], index: 4, kind: input, shape index: {}]
  %s5 = inlined_call_operand.hbm [shape: f32[16,256], index: 5, kind: output, shape index: {}]
  %s6 = sld [smem:[#allocation0]]
  $region69: #{tpu_custom_call.1} parent=0
    _
  %s8 = ssub.s32 1, %s6
  %s9 = scalar_select 0, %s8, %s6
  $region1: #{tpu_custom_call.1} parent=0
    #allocation2 [shape = 'u8[16384]{0}', space=vmem, size = 0x4000, scoped, tag = 'input window, operand 0']
    #allocation3 [shape = 's32[2]{0}', space=sflag, size = 0x8, scoped, tag = 'scoped memory for tpu_custom_call.1']
    #allocation4 [shape = 's32[2]{0}', space=sflag, size = 0x8, scoped, tag = 'scoped memory for tpu_custom_call.1']
    #allocation5 [shape = 'u8[262144]{0}', space=vmem, size = 0x40000, scoped, tag = 'input window, operand 1, single buffered']
    #allocation6 [shape = 's32[1]{0}', space=sflag, size = 0x4, scoped, tag = 'scoped memory for tpu_custom_call.1']
    #allocation7 [shape = 'u8[1024]{0}', space=vmem, size = 0x400, scoped, tag = 'input window, operand 2, single buffered']
    #allocation8 [shape = 'u8[1024]{0}', space=vmem, size = 0x400, scoped, tag = 'input window, operand 4, single buffered']
    #allocation9 [shape = 's32[1]{0}', space=sflag, size = 0x4, scoped, tag = 'scoped memory for tpu_custom_call.1']
    #allocation10 [shape = 'u8[16384]{0}', space=vmem, size = 0x4000, scoped, tag = 'output window, operand 0']
    %10 = vsyncpa [#allocation3], 0
    %s11 = scalar_lea.sflag [#allocation3], 1
    %12 = vsyncpa %s11, 0
    %13 = vsyncpa [#allocation6], 0
    %14 = vsyncpa [#allocation9], 0
    %15 = vsyncpa [#allocation4], 0
    %s16 = scalar_lea.sflag [#allocation4], 1
    %17 = vsyncpa %s16, 0
    loop: start=0, step=1, limit=4
    $region2: #{tpu_custom_call.1} parent=1 // loop_pre_header
      _
    $region3: #{tpu_custom_call.1} parent=1 // loop_header
      %s19 = sphi 0, %s23
      %p20 = scmp.ge.s32.totalorder %s19, 4
      %s29 = sphi 0, %s31
      %s32 = sphi 0, %s29
      %s33 = sphi 0, %s32
      %s49 = sphi 0, %s33
      %s53 = sphi 0, %s53
      %s55 = sphi 0, %s53
      %s56 = sphi 0, %s55
      %s70 = sphi 0, %s56
      %s74 = sphi 0, %s74
      %s76 = sphi 0, %s74
      %s77 = sphi 0, %s76
      %s91 = sphi 0, %s77
      %s95 = sphi 0, %s95
      %s97 = sphi 0, %s95
      %s98 = sphi 0, %s97
      %s112 = sphi 0, %s98
      %s116 = sphi 0, %s116
      %s118 = sphi 0, %s116
      %s119 = sphi 0, %s118
      %s133 = sphi 0, %s119
      %s139 = sphi 0, %s141
      %s142 = sphi 0, %s139
      %s143 = sphi 0, %s142
      %s159 = sphi 0, %s143
    $region4: #{tpu_custom_call.1} parent=1 // loop_header_branch
      %22 = sbr.rel (%p20) target = $region8
    $region5: #{tpu_custom_call.1} parent=1 // loop_body
      %s24 = ssub.s32 %s19, 1
      %s25 = ssub.s32 %s19, 2
      %s26 = sadd.s32 %s19, 1
      %s27 = ssub.s32 %s19, %s26
      %p28 = scmp.eq.s32.totalorder %s27, 0
      %s30 = sadd.s32 %s29, 1
      %s31 = scalar_select %p28, %s29, %s30
      %p34 = pneg %p28
      %p35 = scmp.eq.s32.totalorder %s19, 1
      %p36 = por %p34, %p35
      %p37 = scmp.ne.s32.totalorder %s29, %s32
      %p38 = scmp.eq.s32.totalorder %s19, 0
      %p39 = por %p37, %p38
      %p40 = scmp.ne.s32.totalorder %s29, %s32
      %p41 = scmp.eq.s32.totalorder %s24, 1
      %p42 = por %p40, %p41
      %p43 = scmp.ne.s32.totalorder %s32, %s33
      %p44 = scmp.eq.s32.totalorder %s24, 0
      %p45 = por %p43, %p44
      %p46 = scmp.ne.s32.totalorder %s32, %s33
      %p47 = scmp.eq.s32.totalorder %s25, 1
      %p48 = por %p46, %p47
      %p50 = scmp.ne.s32.totalorder %s33, %s49
      %p51 = scmp.eq.s32.totalorder %s25, 0
      %p52 = por %p50, %p51
      %s54 = sadd.s32 %s53, 1
      %p57 = scmp.eq.s32.totalorder %s19, 1
      %p58 = scmp.ne.s32.totalorder %s53, %s55
      %p59 = scmp.eq.s32.totalorder %s19, 0
      %p60 = por %p58, %p59
      %p61 = scmp.ne.s32.totalorder %s53, %s55
      %p62 = scmp.eq.s32.totalorder %s24, 1
      %p63 = por %p61, %p62
      %p64 = scmp.ne.s32.totalorder %s55, %s56
      %p65 = scmp.eq.s32.totalorder %s24, 0
      %p66 = por %p64, %p65
      %p67 = scmp.ne.s32.totalorder %s55, %s56
      %p68 = scmp.eq.s32.totalorder %s25, 1
      %p69 = por %p67, %p68
      %p71 = scmp.ne.s32.totalorder %s56, %s70
      %p72 = scmp.eq.s32.totalorder %s25, 0
      %p73 = por %p71, %p72
      %s75 = sadd.s32 %s74, 1
      %p78 = scmp.eq.s32.totalorder %s19, 1
      %p79 = scmp.ne.s32.totalorder %s74, %s76
      %p80 = scmp.eq.s32.totalorder %s19, 0
      %p81 = por %p79, %p80
      %p82 = scmp.ne.s32.totalorder %s74, %s76
      %p83 = scmp.eq.s32.totalorder %s24, 1
      %p84 = por %p82, %p83
      %p85 = scmp.ne.s32.totalorder %s76, %s77
      %p86 = scmp.eq.s32.totalorder %s24, 0
      %p87 = por %p85, %p86
      %p88 = scmp.ne.s32.totalorder %s76, %s77
      %p89 = scmp.eq.s32.totalorder %s25, 1
      %p90 = por %p88, %p89
      %p92 = scmp.ne.s32.totalorder %s77, %s91
      %p93 = scmp.eq.s32.totalorder %s25, 0
      %p94 = por %p92, %p93
      %s96 = sadd.s32 %s95, 1
      %p99 = scmp.eq.s32.totalorder %s19, 1
      %p100 = scmp.ne.s32.totalorder %s95, %s97
      %p101 = scmp.eq.s32.totalorder %s19, 0
      %p102 = por %p100, %p101
      %p103 = scmp.ne.s32.totalorder %s95, %s97
      %p104 = scmp.eq.s32.totalorder %s24, 1
      %p105 = por %p103, %p104
      %p106 = scmp.ne.s32.totalorder %s97, %s98
      %p107 = scmp.eq.s32.totalorder %s24, 0
      %p108 = por %p106, %p107
      %p109 = scmp.ne.s32.totalorder %s97, %s98
      %p110 = scmp.eq.s32.totalorder %s25, 1
      %p111 = por %p109, %p110
      %p113 = scmp.ne.s32.totalorder %s98, %s112
      %p114 = scmp.eq.s32.totalorder %s25, 0
      %p115 = por %p113, %p114
      %s117 = sadd.s32 %s116, 1
      %p120 = scmp.eq.s32.totalorder %s19, 1
      %p121 = scmp.ne.s32.totalorder %s116, %s118
      %p122 = scmp.eq.s32.totalorder %s19, 0
      %p123 = por %p121, %p122
      %p124 = scmp.ne.s32.totalorder %s116, %s118
      %p125 = scmp.eq.s32.totalorder %s24, 1
      %p126 = por %p124, %p125
      %p127 = scmp.ne.s32.totalorder %s118, %s119
      %p128 = scmp.eq.s32.totalorder %s24, 0
      %p129 = por %p127, %p128
      %p130 = scmp.ne.s32.totalorder %s118, %s119
      %p131 = scmp.eq.s32.totalorder %s25, 1
      %p132 = por %p130, %p131
      %p134 = scmp.ne.s32.totalorder %s119, %s133
      %p135 = scmp.eq.s32.totalorder %s25, 0
      %p136 = por %p134, %p135
      %s137 = ssub.s32 %s19, %s26
      %p138 = scmp.eq.s32.totalorder %s137, 0
      %s140 = sadd.s32 %s139, 1
      %s141 = scalar_select %p138, %s139, %s140
      %p144 = pneg %p138
      %p145 = scmp.eq.s32.totalorder %s19, 1
      %p146 = por %p144, %p145
      %p147 = scmp.ne.s32.totalorder %s139, %s142
      %p148 = scmp.eq.s32.totalorder %s19, 0
      %p149 = por %p147, %p148
      %p150 = scmp.ne.s32.totalorder %s139, %s142
      %p151 = scmp.eq.s32.totalorder %s24, 1
      %p152 = por %p150, %p151
      %p153 = scmp.ne.s32.totalorder %s142, %s143
      %p154 = scmp.eq.s32.totalorder %s24, 0
      %p155 = por %p153, %p154
      %p156 = scmp.ne.s32.totalorder %s142, %s143
      %p157 = scmp.eq.s32.totalorder %s25, 1
      %p158 = por %p156, %p157
      %p160 = scmp.ne.s32.totalorder %s143, %s159
      %p161 = scmp.eq.s32.totalorder %s25, 0
      %p162 = por %p160, %p161
      %p163 = scmp.le.s32.totalorder 1, %s19
      %p164 = scmp.lt.s32.totalorder %s19, 3
      %p165 = pnand %p163, %p164
      %p166 = pneg %p165
      // Predicated region
      $region9: #{tpu_custom_call.1} parent=5 // pred_check
        _
      $region10: #{tpu_custom_call.1} parent=5 // pred_check_branch
        %168 = sbr.rel (%p165) target = $region12
      $region11: #{tpu_custom_call.1} parent=5 // pred_region
        %s169 = ssub.s32 %s19, 1
        // Predicated region
        $region13: #{tpu_custom_call.1} parent=11 // pred_check
          %p170 = pneg %p66
        $region14: #{tpu_custom_call.1} parent=11 // pred_check_branch
          %172 = sbr.rel (%p170) target = $region16
        $region15: #{tpu_custom_call.1} parent=11 // pred_region
          %174 = vsyncadd [#allocation6], 0
          %s175 = sshll.u32 %s1, 4
          %s176 = int_to_ptr.hbm [resolvable:$true] %s175
          %s177 = sshll.u32 [#allocation5], 4
          %s178 = int_to_ptr.vmem [resolvable:$true] %s177
          %183 = dma.hbm_to_vmem [thread:$0]  %s176, 8192, %s178, [#allocation6], 256, 256, 16
        $region16: #{tpu_custom_call.1} parent=11 // pred_fallthru
          _
        // Predicated region
        $region17: #{tpu_custom_call.1} parent=11 // pred_check
          %p184 = pneg %p87
        $region18: #{tpu_custom_call.1} parent=11 // pred_check_branch
          %186 = sbr.rel (%p184) target = $region20
        $region19: #{tpu_custom_call.1} parent=11 // pred_region
          %188 = vsyncadd [#allocation6], 0
          %s190 = sshll.u32 %s2, 4
          %s191 = int_to_ptr.hbm [resolvable:$true] %s190
          %s192 = sshll.u32 [#allocation7], 4
          %s193 = int_to_ptr.vmem [resolvable:$true] %s192
          %195 = dma.hbm_to_vmem [thread:$0]  %s191, 32, %s193, [#allocation6]
        $region20: #{tpu_custom_call.1} parent=11 // pred_fallthru
          _
        // Predicated region
        $region21: #{tpu_custom_call.1} parent=11 // pred_check
          %p196 = pneg %p108
        $region22: #{tpu_custom_call.1} parent=11 // pred_check_branch
          %198 = sbr.rel (%p196) target = $region24
        $region23: #{tpu_custom_call.1} parent=11 // pred_region
          _
        $region24: #{tpu_custom_call.1} parent=11 // pred_fallthru
          _
        // Predicated region
        $region25: #{tpu_custom_call.1} parent=11 // pred_check
          %p199 = pneg %p129
        $region26: #{tpu_custom_call.1} parent=11 // pred_check_branch
          %201 = sbr.rel (%p199) target = $region28
        $region27: #{tpu_custom_call.1} parent=11 // pred_region
          %203 = vsyncadd [#allocation9], 0
          %s205 = sshll.u32 %s4, 4
          %s206 = int_to_ptr.hbm [resolvable:$true] %s205
          %s207 = sshll.u32 [#allocation8], 4
          %s208 = int_to_ptr.vmem [resolvable:$true] %s207
          %210 = dma.hbm_to_vmem [thread:$0]  %s206, 32, %s208, [#allocation9]
        $region28: #{tpu_custom_call.1} parent=11 // pred_fallthru
          _
      $region12: #{tpu_custom_call.1} parent=5 // pred_fallthru
        _
      %p211 = scmp.lt.s32.totalorder %s19, 2
      // Predicated region
      $region29: #{tpu_custom_call.1} parent=5 // pred_check
        %p212 = pneg %p211
      $region30: #{tpu_custom_call.1} parent=5 // pred_check_branch
        %214 = sbr.rel (%p212) target = $region32
      $region31: #{tpu_custom_call.1} parent=5 // pred_region
        // Predicated region
        $region33: #{tpu_custom_call.1} parent=31 // pred_check
          %p215 = pneg %p39
        $region34: #{tpu_custom_call.1} parent=31 // pred_check_branch
          %217 = sbr.rel (%p215) target = $region36
        $region35: #{tpu_custom_call.1} parent=31 // pred_region
          %s218 = sand.u32 %s29, 1
          %s219 = scalar_lea.sflag [#allocation3], %s218
          %s220 = sand.u32 %s29, 1
          %s221 = smul.addr %s220, 16
          %s222 = scalar_lea.vmem [#allocation2], %s221
          %224 = vsyncadd %s219, 0
          %s225 = smul.addr %s19, 2
          %s226 = smul.addr %s225, 8
          %s227 = scalar_lea.hbm %s0, %s226
          %s229 = sshll.u32 %s227, 4
          %s230 = int_to_ptr.hbm [resolvable:$true] %s229
          %s231 = sshll.u32 %s222, 4
          %s232 = int_to_ptr.vmem [resolvable:$true] %s231
          %234 = dma.hbm_to_vmem [thread:$0]  %s230, 256, %s232, %s219
        $region36: #{tpu_custom_call.1} parent=31 // pred_fallthru
          _
      $region32: #{tpu_custom_call.1} parent=5 // pred_fallthru
        _
      %p235 = scmp.le.s32.totalorder 1, %s19
      %p236 = scmp.lt.s32.totalorder %s19, 3
      %p237 = pnand %p235, %p236
      %p238 = pneg %p237
      // Predicated region
      $region37: #{tpu_custom_call.1} parent=5 // pred_check
        _
      $region38: #{tpu_custom_call.1} parent=5 // pred_check_branch
        %240 = sbr.rel (%p237) target = $region40
      $region39: #{tpu_custom_call.1} parent=5 // pred_region
        %s241 = ssub.s32 %s19, 1
        %s242 = sand.u32 %s32, 1
        %s243 = scalar_lea.sflag [#allocation3], %s242
        %s244 = sand.u32 %s32, 1
        %s245 = smul.addr %s244, 16
        %s246 = scalar_lea.vmem [#allocation2], %s245
        // Predicated region
        $region41: #{tpu_custom_call.1} parent=39 // pred_check
          %p247 = pneg %p45
        $region42: #{tpu_custom_call.1} parent=39 // pred_check_branch
          %249 = sbr.rel (%p247) target = $region44
        $region43: #{tpu_custom_call.1} parent=39 // pred_region
          %251 = dma.done %s243, 256
        $region44: #{tpu_custom_call.1} parent=39 // pred_fallthru
          _
        // Predicated region
        $region45: #{tpu_custom_call.1} parent=39 // pred_check
          %p252 = pneg %p66
        $region46: #{tpu_custom_call.1} parent=39 // pred_check_branch
          %254 = sbr.rel (%p252) target = $region48
        $region47: #{tpu_custom_call.1} parent=39 // pred_region
          %256 = dma.done [#allocation6], 8192
        $region48: #{tpu_custom_call.1} parent=39 // pred_fallthru
          _
        // Predicated region
        $region49: #{tpu_custom_call.1} parent=39 // pred_check
          %p257 = pneg %p87
        $region50: #{tpu_custom_call.1} parent=39 // pred_check_branch
          %259 = sbr.rel (%p257) target = $region52
        $region51: #{tpu_custom_call.1} parent=39 // pred_region
          %261 = dma.done [#allocation6], 32
        $region52: #{tpu_custom_call.1} parent=39 // pred_fallthru
          _
        // Predicated region
        $region53: #{tpu_custom_call.1} parent=39 // pred_check
          %p262 = pneg %p129
        $region54: #{tpu_custom_call.1} parent=39 // pred_check_branch
          %264 = sbr.rel (%p262) target = $region56
        $region55: #{tpu_custom_call.1} parent=39 // pred_region
          %266 = dma.done [#allocation9], 32
        $region56: #{tpu_custom_call.1} parent=39 // pred_fallthru
          _
        %s267 = sand.u32 %s32, 1
        %s268 = scalar_lea.sflag [#allocation3], %s267
        %s269 = sand.u32 %s32, 1
        %s270 = smul.addr %s269, 16
        %s271 = scalar_lea.vmem [#allocation2], %s270
        %p272 = pneg %p45
        %p273 = pneg %p42
        %p274 = pneg %p66
        %p275 = pneg %p63
        %p276 = pneg %p87
        %p277 = pneg %p84
        %p278 = pneg %p108
        %p279 = pneg %p105
        %p280 = pneg %p129
        %p281 = pneg %p126
        %p282 = pneg %p155
        %p283 = pneg %p152
        %s284 = sand.u32 %s142, 1
        %s285 = scalar_lea.sflag [#allocation4], %s284
        %s286 = sand.u32 %s142, 1
        %s287 = smul.addr %s286, 16
        %s288 = scalar_lea.vmem [#allocation10], %s287
        %v289 = vld [vmem:[%s246] sm:$0xff]
        %v290 = vld [vmem:[%s246 + $0x8] sm:$0xff]
        %v291 = vld [vmem:[#allocation5] sm:$0xff]
        %v292 = vld [vmem:[#allocation5 + $0x8] sm:$0xff]
        %v293 = vld [vmem:[#allocation5 + $0x10] sm:$0xff]
        %v294 = vld [vmem:[#allocation5 + $0x18] sm:$0xff]
        %v295 = vld [vmem:[#allocation5 + $0x20] sm:$0xff]
        %v296 = vld [vmem:[#allocation5 + $0x28] sm:$0xff]
        %v297 = vld [vmem:[#allocation5 + $0x30] sm:$0xff]
        %v298 = vld [vmem:[#allocation5 + $0x38] sm:$0xff]
        %v299 = vld [vmem:[#allocation5 + $0x40] sm:$0xff]
        %v300 = vld [vmem:[#allocation5 + $0x48] sm:$0xff]
        %v301 = vld [vmem:[#allocation5 + $0x50] sm:$0xff]
        %v302 = vld [vmem:[#allocation5 + $0x58] sm:$0xff]
        %v303 = vld [vmem:[#allocation5 + $0x60] sm:$0xff]
        %v304 = vld [vmem:[#allocation5 + $0x68] sm:$0xff]
        %v305 = vld [vmem:[#allocation5 + $0x70] sm:$0xff]
        %v306 = vld [vmem:[#allocation5 + $0x78] sm:$0xff]
        %v307 = vld [vmem:[#allocation5 + $0x80] sm:$0xff]
        %v308 = vld [vmem:[#allocation5 + $0x88] sm:$0xff]
        %v309 = vld [vmem:[#allocation5 + $0x90] sm:$0xff]
        %v310 = vld [vmem:[#allocation5 + $0x98] sm:$0xff]
        %v311 = vld [vmem:[#allocation5 + $0xa0] sm:$0xff]
        %v312 = vld [vmem:[#allocation5 + $0xa8] sm:$0xff]
        %v313 = vld [vmem:[#allocation5 + $0xb0] sm:$0xff]
        %v314 = vld [vmem:[#allocation5 + $0xb8] sm:$0xff]
        %v315 = vld [vmem:[#allocation5 + $0xc0] sm:$0xff]
        %v316 = vld [vmem:[#allocation5 + $0xc8] sm:$0xff]
        %v317 = vld [vmem:[#allocation5 + $0xd0] sm:$0xff]
        %v318 = vld [vmem:[#allocation5 + $0xd8] sm:$0xff]
        %v319 = vld [vmem:[#allocation5 + $0xe0] sm:$0xff]
        %v320 = vld [vmem:[#allocation5 + $0xe8] sm:$0xff]
        %v321 = vld [vmem:[#allocation5 + $0xf0] sm:$0xff]
        %v322 = vld [vmem:[#allocation5 + $0xf8] sm:$0xff]
        %v323 = vld [vmem:[#allocation5 + $0x100] sm:$0xff]
        %v324 = vld [vmem:[#allocation5 + $0x108] sm:$0xff]
        %v325 = vld [vmem:[#allocation5 + $0x110] sm:$0xff]
        %v326 = vld [vmem:[#allocation5 + $0x118] sm:$0xff]
        %v327 = vld [vmem:[#allocation5 + $0x120] sm:$0xff]
        %v328 = vld [vmem:[#allocation5 + $0x128] sm:$0xff]
        %v329 = vld [vmem:[#allocation5 + $0x130] sm:$0xff]
        %v330 = vld [vmem:[#allocation5 + $0x138] sm:$0xff]
        %v331 = vld [vmem:[#allocation5 + $0x140] sm:$0xff]
        %v332 = vld [vmem:[#allocation5 + $0x148] sm:$0xff]
        %v333 = vld [vmem:[#allocation5 + $0x150] sm:$0xff]
        %v334 = vld [vmem:[#allocation5 + $0x158] sm:$0xff]
        %v335 = vld [vmem:[#allocation5 + $0x160] sm:$0xff]
        %v336 = vld [vmem:[#allocation5 + $0x168] sm:$0xff]
        %v337 = vld [vmem:[#allocation5 + $0x170] sm:$0xff]
        %v338 = vld [vmem:[#allocation5 + $0x178] sm:$0xff]
        %v339 = vld [vmem:[#allocation5 + $0x180] sm:$0xff]
        %v340 = vld [vmem:[#allocation5 + $0x188] sm:$0xff]
        %v341 = vld [vmem:[#allocation5 + $0x190] sm:$0xff]
        %v342 = vld [vmem:[#allocation5 + $0x198] sm:$0xff]
        %v343 = vld [vmem:[#allocation5 + $0x1a0] sm:$0xff]
        %v344 = vld [vmem:[#allocation5 + $0x1a8] sm:$0xff]
        %v345 = vld [vmem:[#allocation5 + $0x1b0] sm:$0xff]
        %v346 = vld [vmem:[#allocation5 + $0x1b8] sm:$0xff]
        %v347 = vld [vmem:[#allocation5 + $0x1c0] sm:$0xff]
        %v348 = vld [vmem:[#allocation5 + $0x1c8] sm:$0xff]
        %v349 = vld [vmem:[#allocation5 + $0x1d0] sm:$0xff]
        %v350 = vld [vmem:[#allocation5 + $0x1d8] sm:$0xff]
        %v351 = vld [vmem:[#allocation5 + $0x1e0] sm:$0xff]
        %v352 = vld [vmem:[#allocation5 + $0x1e8] sm:$0xff]
        %v353 = vld [vmem:[#allocation5 + $0x1f0] sm:$0xff]
        %v354 = vld [vmem:[#allocation5 + $0x1f8] sm:$0xff]
        %v355 = vld [vmem:[#allocation7] sm:$0x3]
        %v357 = vperm.slane %v355, 0
        %v358 = vperm.slane %v355, 1
        %361 = vmatpush.xpose.msra.mxu0 %v321
        %362 = vmatpush.xpose.msra.mxu0 %v319
        %363 = vmatpush.xpose.msra.mxu0 %v317
        %364 = vmatpush.xpose.msra.mxu0 %v315
        %365 = vmatpush.xpose.msra.mxu0 %v313
        %366 = vmatpush.xpose.msra.mxu0 %v311
        %367 = vmatpush.xpose.msra.mxu0 %v309
        %368 = vmatpush.xpose.msra.mxu0 %v307
        %369 = vmatpush.xpose.msra.mxu0 %v305
        %370 = vmatpush.xpose.msra.mxu0 %v303
        %371 = vmatpush.xpose.msra.mxu0 %v301
        %372 = vmatpush.xpose.msra.mxu0 %v299
        %373 = vmatpush.xpose.msra.mxu0 %v297
        %374 = vmatpush.xpose.msra.mxu0 %v295
        %375 = vmatpush.xpose.msra.mxu0 %v293
        %376 = vmatpush.xpose.msra.mxu0 %v291
        %377 = vmatmul.f32.gmra.mxu0 %v289
        %v378 = vpop.f32.mrf.mxu0
        %v379 = vadd.f32 %v357, %v378
        %380 = vdwg.mxu0
        %381 = vmatpush.xpose.msra.mxu0 %v322
        %382 = vmatpush.xpose.msra.mxu0 %v320
        %383 = vmatpush.xpose.msra.mxu0 %v318
        %384 = vmatpush.xpose.msra.mxu0 %v316
        %385 = vmatpush.xpose.msra.mxu0 %v314
        %386 = vmatpush.xpose.msra.mxu0 %v312
        %387 = vmatpush.xpose.msra.mxu0 %v310
        %388 = vmatpush.xpose.msra.mxu0 %v308
        %389 = vmatpush.xpose.msra.mxu0 %v306
        %390 = vmatpush.xpose.msra.mxu0 %v304
        %391 = vmatpush.xpose.msra.mxu0 %v302
        %392 = vmatpush.xpose.msra.mxu0 %v300
        %393 = vmatpush.xpose.msra.mxu0 %v298
        %394 = vmatpush.xpose.msra.mxu0 %v296
        %395 = vmatpush.xpose.msra.mxu0 %v294
        %396 = vmatpush.xpose.msra.mxu0 %v292
        %397 = vmatmul.f32.gmra.mxu0 %v290
        %v398 = vpop.f32.mrf.mxu0
        %v399 = vadd.f32 %v379, %v398
        %400 = vdwg.mxu0
        %401 = vmatpush.xpose.msra.mxu0 %v353
        %402 = vmatpush.xpose.msra.mxu0 %v351
        %403 = vmatpush.xpose.msra.mxu0 %v349
        %404 = vmatpush.xpose.msra.mxu0 %v347
        %405 = vmatpush.xpose.msra.mxu0 %v345
        %406 = vmatpush.xpose.msra.mxu0 %v343
        %407 = vmatpush.xpose.msra.mxu0 %v341
        %408 = vmatpush.xpose.msra.mxu0 %v339
        %409 = vmatpush.xpose.msra.mxu0 %v337
        %410 = vmatpush.xpose.msra.mxu0 %v335
        %411 = vmatpush.xpose.msra.mxu0 %v333
        %412 = vmatpush.xpose.msra.mxu0 %v331
        %413 = vmatpush.xpose.msra.mxu0 %v329
        %414 = vmatpush.xpose.msra.mxu0 %v327
        %415 = vmatpush.xpose.msra.mxu0 %v325
        %416 = vmatpush.xpose.msra.mxu0 %v323
        %417 = vmatmul.f32.gmra.mxu0 %v289
        %v418 = vpop.f32.mrf.mxu0
        %v419 = vadd.f32 %v358, %v418
        %420 = vdwg.mxu0
        %421 = vmatpush.xpose.msra.mxu0 %v354
        %422 = vmatpush.xpose.msra.mxu0 %v352
        %423 = vmatpush.xpose.msra.mxu0 %v350
        %424 = vmatpush.xpose.msra.mxu0 %v348
        %425 = vmatpush.xpose.msra.mxu0 %v346
        %426 = vmatpush.xpose.msra.mxu0 %v344
        %427 = vmatpush.xpose.msra.mxu0 %v342
        %428 = vmatpush.xpose.msra.mxu0 %v340
        %429 = vmatpush.xpose.msra.mxu0 %v338
        %430 = vmatpush.xpose.msra.mxu0 %v336
        %431 = vmatpush.xpose.msra.mxu0 %v334
        %432 = vmatpush.xpose.msra.mxu0 %v332
        %433 = vmatpush.xpose.msra.mxu0 %v330
        %434 = vmatpush.xpose.msra.mxu0 %v328
        %435 = vmatpush.xpose.msra.mxu0 %v326
        %436 = vmatpush.xpose.msra.mxu0 %v324
        %437 = vmatmul.f32.gmra.mxu0 %v290
        %v438 = vpop.f32.mrf.mxu0
        %v439 = vadd.f32 %v419, %v438
        %440 = vdwg.mxu0
        %v441 = vmul.f32 %v399, 0.5
        %v442 = vmul.f32 %v439, 0.5
        %v443 = vmul.f32 %v399, 0.70710677
        %v444 = vmul.f32 %v439, 0.70710677
        %v445 = vand.u32 2147483647, %v443
        %v446 = vand.u32 2147483647, %v444
        %v447 = vmul.f32 %v445, 0.3275911
        %v448 = vmul.f32 %v446, 0.3275911
        %v449 = vadd.f32 %v447, 1.0
        %v450 = vadd.f32 %v448, 1.0
        %v451 = vrcp.pop %v449
        %v452 = vmul.f32 %v449, %v451
        %v453 = vsub.f32 1.0, %v452
        %v454 = vmul.f32 %v451, %v453
        %v455 = vadd.f32 %v451, %v454
        %vm456 = vweird.f32 %v449
        %vm457 = vweird.f32 %v451
        %vm458 = vmor %vm456, %vm457
        %v459 = vsel %vm458, %v451, %v455
        %v460 = vand.u32 2147483647, %v449
        %vm461 = vcmp.eq.f32.partialorder %v460, 8.507059e+37
        %v462 = vand.u32 %v449, 2147483648
        %v463 = vor.u32 1.1754944e-38, %v462
        %v464 = vsel %vm461, %v463, %v459
        %v465 = vmul.f32 1.0, %v464
        %v466 = vrcp.pop %v450
        %v467 = vmul.f32 %v450, %v466
        %v468 = vsub.f32 1.0, %v467
        %v469 = vmul.f32 %v466, %v468
        %v470 = vadd.f32 %v466, %v469
        %vm471 = vweird.f32 %v450
        %vm472 = vweird.f32 %v466
        %vm473 = vmor %vm471, %vm472
        %v474 = vsel %vm473, %v466, %v470
        %v475 = vand.u32 2147483647, %v450
        %vm476 = vcmp.eq.f32.partialorder %v475, 8.507059e+37
        %v477 = vand.u32 %v450, 2147483648
        %v478 = vor.u32 1.1754944e-38, %v477
        %v479 = vsel %vm476, %v478, %v474
        %v480 = vmul.f32 1.0, %v479
        %v481 = vmul.f32 %v465, 1.0614054
        %v482 = vmul.f32 %v480, 1.0614054
        %v483 = vadd.f32 %v481, -1.4531521
        %v484 = vadd.f32 %v482, -1.4531521
        %v485 = vmul.f32 %v483, %v465
        %v486 = vmul.f32 %v484, %v480
        %v487 = vadd.f32 %v485, 1.4214138
        %v488 = vadd.f32 %v486, 1.4214138
        %v489 = vmul.f32 %v487, %v465
        %v490 = vmul.f32 %v488, %v480
        %v491 = vadd.f32 %v489, -0.28449672
        %v492 = vadd.f32 %v490, -0.28449672
        %v493 = vmul.f32 %v491, %v465
        %v494 = vmul.f32 %v492, %v480
        %v495 = vadd.f32 %v493, 0.2548296
        %v496 = vadd.f32 %v494, 0.2548296
        %v497 = vmul.f32 %v495, %v465
        %v498 = vmul.f32 %v496, %v480
        %v499 = vsub.f32 0.0, %v445
        %v500 = vsub.f32 0.0, %v446
        %v501 = vmul.f32 %v499, %v445
        %v502 = vmul.f32 %v500, %v446
        %v503 = vmul.f32 %v501, 1.442695
        %v504 = vpow.pop %v503
        %v505 = vmul.f32 %v502, 1.442695
        %v506 = vpow.pop %v505
        %v507 = vmul.f32 %v497, %v504
        %v508 = vmul.f32 %v498, %v506
        %v509 = vsub.f32 1.0, %v507
        %v510 = vsub.f32 1.0, %v508
        %vm511 = vcmp.ge.f32.partialorder %v443, 0.0
        %vm512 = vcmp.ge.f32.partialorder %v444, 0.0
        %v513 = vsub.f32 0.0, %v509
        %v514 = vsub.f32 0.0, %v510
        %v515 = vsel %vm511, %v509, %v513
        %v516 = vsel %vm512, %v510, %v514
        %v517 = vadd.f32 %v515, 1.0
        %v518 = vadd.f32 %v516, 1.0
        %v519 = vmul.f32 %v441, %v517
        %v520 = vmul.f32 %v442, %v518
        %v521 = vadd.f32 %v519, %v520
        %522 = vadd.xlane.f32.xlu0 %v521
        %v523 = vpop.xlane.xlu0 %522
        %v524 = vrcp.pop 256.0
        %v525 = vmul.f32 256.0, %v524
        %v526 = vsub.f32 1.0, %v525
        %v527 = vmul.f32 %v524, %v526
        %v528 = vadd.f32 %v524, %v527
        %vm529 = vweird.f32 %v524
        %v530 = vsel %vm529, %v524, %v528
        %v531 = vmul.f32 %v523, %v530
        %v532 = vmul.f32 %v519, %v519
        %v533 = vmul.f32 %v520, %v520
        %v534 = vadd.f32 %v532, %v533
        %535 = vadd.xlane.f32.xlu0 %v534
        %v536 = vpop.xlane.xlu0 %535
        %v537 = vmul.f32 %v536, %v530
        %v538 = vmul.f32 %v531, %v531
        %v539 = vsub.f32 %v537, %v538
        %v540 = vsub.f32 %v519, %v531
        %v541 = vsub.f32 %v520, %v531
        %v542 = vadd.f32 %v539, 1e-12
        %v543 = vrsqrt.pop %v542
        %v544 = vmul.f32 %v543, %v542
        %v545 = vmul.f32 %v544, %v543
        %v546 = vmul.f32 0.5, %v545
        %v547 = vsub.f32 1.5, %v546
        %v548 = vmul.f32 %v543, %v547
        %vm549 = vweird.f32 %v542
        %vm550 = vweird.f32 %v543
        %vm551 = vmor %vm549, %vm550
        %v552 = vsel %vm551, %v543, %v548
        %v553 = vmul.f32 %v540, %v552
        %v554 = vmul.f32 %v541, %v552
        %v555 = vld [vmem:[%s3] sm:$0x3]
        %v557 = vperm.slane %v555, 0
        %v558 = vperm.slane %v555, 1
        %v561 = vmul.f32 %v553, %v557
        %v562 = vmul.f32 %v554, %v558
        %v563 = vld [vmem:[#allocation8] sm:$0x3]
        %v565 = vperm.slane %v563, 0
        %v566 = vperm.slane %v563, 1
        %v569 = vadd.f32 %v561, %v565
        %v570 = vadd.f32 %v562, %v566
        %571 = vst [vmem:[%s288] sm:$0xff] %v569
        %572 = vst [vmem:[%s288 + $0x8] sm:$0xff] %v570
        %s573 = sand.u32 %s142, 1
        %s574 = scalar_lea.sflag [#allocation4], %s573
        %s575 = sand.u32 %s142, 1
        %s576 = smul.addr %s575, 16
        %s577 = scalar_lea.vmem [#allocation10], %s576
        // Predicated region
        $region57: #{tpu_custom_call.1} parent=39 // pred_check
          %p578 = pneg %p152
        $region58: #{tpu_custom_call.1} parent=39 // pred_check_branch
          %580 = sbr.rel (%p578) target = $region60
        $region59: #{tpu_custom_call.1} parent=39 // pred_region
          %582 = vsyncadd %s574, 0
          %s583 = smul.addr %s24, 2
          %s584 = smul.addr %s583, 8
          %s585 = scalar_lea.hbm %s5, %s584
          %s587 = sshll.u32 %s577, 4
          %s588 = int_to_ptr.vmem [resolvable:$true] %s587
          %s589 = sshll.u32 %s585, 4
          %s590 = int_to_ptr.hbm [resolvable:$true] %s589
          %592 = dma.vmem_to_hbm [thread:$0]  %s588, 256, %s590, %s574
        $region60: #{tpu_custom_call.1} parent=39 // pred_fallthru
          _
      $region40: #{tpu_custom_call.1} parent=5 // pred_fallthru
        _
      %p593 = scmp.le.s32.totalorder 2, %s19
      // Predicated region
      $region61: #{tpu_custom_call.1} parent=5 // pred_check
        %p594 = pneg %p593
      $region62: #{tpu_custom_call.1} parent=5 // pred_check_branch
        %596 = sbr.rel (%p594) target = $region64
      $region63: #{tpu_custom_call.1} parent=5 // pred_region
        %s597 = ssub.s32 %s19, 2
        // Predicated region
        $region65: #{tpu_custom_call.1} parent=63 // pred_check
          %p598 = pneg %p158
        $region66: #{tpu_custom_call.1} parent=63 // pred_check_branch
          %600 = sbr.rel (%p598) target = $region68
        $region67: #{tpu_custom_call.1} parent=63 // pred_region
          %s601 = sand.u32 %s143, 1
          %s602 = scalar_lea.sflag [#allocation4], %s601
          %s603 = sand.u32 %s143, 1
          %s604 = smul.addr %s603, 16
          %s605 = scalar_lea.vmem [#allocation10], %s604
          %607 = dma.done %s602, 256
        $region68: #{tpu_custom_call.1} parent=63 // pred_fallthru
          _
      $region64: #{tpu_custom_call.1} parent=5 // pred_fallthru
        _
    $region6: #{tpu_custom_call.1} parent=1 // loop_footer
      %s23 = sadd.s32 1, %s19
    $region7: #{tpu_custom_call.1} parent=1 // loop_footer_branch
      %18 = sbr.rel target = $region3
    $region8: #{tpu_custom_call.1} parent=1 // loop_exit
      _
    %608 = vsyncpa [#allocation3], 1
    %s609 = scalar_lea.sflag [#allocation3], 1
    %610 = vsyncpa %s609, 1
    %611 = vsyncpa [#allocation6], 1
    %612 = vsyncpa [#allocation9], 1
    %613 = vsyncpa [#allocation4], 1
    %s614 = scalar_lea.sflag [#allocation4], 1
    %615 = vsyncpa %s614, 1

</llo_original>
